<compile_context>
chip_gen: v7x
topology: tpu7x:2x2x1
jax: 0.10.0
libtpu: 0.0.40
codegen_flags: <defaults>
</compile_context>

<pallas_src>
import functools

import jax
import jax.numpy as jnp
import numpy as np
from jax import lax
from jax.experimental import pallas as pl
from jax.experimental.pallas import tpu as pltpu


def _quantize_bits_kernel(xr_ref, o_ref, *, B):
    """Quantize + bit-extract on a lane-dense (TB, N*B) tile.

    xr_ref holds the input already repeated B times along the last axis
    (xr[:, c] == x[:, c // B]), so every op here is a full-width 2-D VPU op and
    the output store is an unmasked, lane-dense vst.
    """
    step = float(2 ** B)
    x = xr_ref[...]                                     # (TB, NB) float32
    v = jnp.round(x * step - 0.5).astype(jnp.int32)     # half-to-even, like torch.round
    v = v & 0xFF                                        # emulate torch .to(uint8) (mod 256)

    tb, nb = x.shape
    col = lax.broadcasted_iota(jnp.int32, (tb, nb), 1)  # output column index
    if (B & (B - 1)) == 0:                              # B is a power of two
        k = col & (B - 1)
    else:
        k = col % B
    exp = (B - 1) - k                                   # MSB-first within each group of B
    o_ref[...] = (jnp.right_shift(v, exp) & 1).astype(jnp.float32)


def quantization_layer(x, B, *, tile_rows=None):
    """QuantizationLayer(B).forward(x): x (batch, N) float32 -> (batch, N*B) float32."""
    batch, n = x.shape
    nb = n * B

    # Lane-dense input presentation: repeat each element B times along the last
    # axis outside the kernel (XLA broadcast + free row-major reshape).
    x_rep = jnp.repeat(x, B, axis=1)                    # (batch, N*B) float32

    # Row tile: multiple of 8 (f32 sublane rule) or the full batch dim.
    # Keep 2 buffers x (input tile + output tile) under ~32 MiB so the block
    # still double-buffers on v7x's 64 MiB VMEM (and trivially on v5e/v6e).
    if tile_rows is None:
        vmem_budget = 32 * 1024 * 1024
        bytes_per_row = 2 * 2 * nb * 4                  # dbl-buffered in + out, f32
        tile_rows = max(8, min(512, vmem_budget // max(bytes_per_row, 1)))
        tile_rows = max(8, (tile_rows // 8) * 8)
    if tile_rows >= batch:
        tile_rows = batch                               # full-dim block is always legal
    elif tile_rows % 8 != 0:
        tile_rows = max(8, (tile_rows // 8) * 8)

    grid = (pl.cdiv(batch, tile_rows),)

    return pl.pallas_call(
        functools.partial(_quantize_bits_kernel, B=B),
        out_shape=jax.ShapeDtypeStruct((batch, nb), jnp.float32),
        grid=grid,
        in_specs=[pl.BlockSpec((tile_rows, nb), lambda i: (i, 0))],
        out_specs=pl.BlockSpec((tile_rows, nb), lambda i: (i, 0)),
        compiler_params=pltpu.CompilerParams(
            dimension_semantics=("parallel",),
            vmem_limit_bytes=64 * 1024 * 1024,
        ),
    )(x_rep)


def _reference_numpy(x_np, B):
    """Pure-numpy reference mirroring the PyTorch forward (f32 rounding like the kernel)."""
    step = np.float32(2 ** B)
    v = np.round(x_np.astype(np.float32) * step - np.float32(0.5)).astype(np.int64) & 0xFF
    shifts = np.arange(B - 1, -1, -1, dtype=np.int64)[None, None, :]
    bits = ((v[:, :, None] >> shifts) & 1).astype(np.float32)
    return bits.reshape(x_np.shape[0], -1)


# TODO(synk): the custom backward (grad averaged over each group of B bits) is a
# training-only autograd rule and is not implemented here (forward-pass only).

if __name__ == "__main__":
    B = 4
    batch, n = 8, 128

    key = jax.random.PRNGKey(0)
    # Typical CSI-feedback inputs are in [0, 1) (sigmoid outputs upstream).
    x = jax.random.uniform(key, (batch, n), dtype=jnp.float32)

    out = quantization_layer(x, B)
    out = jax.block_until_ready(out)

    ref = _reference_numpy(np.asarray(x), B)
    assert out.shape == (batch, n * B), out.shape
    assert out.dtype == jnp.float32
    np.testing.assert_allclose(np.asarray(out), ref, atol=0, rtol=0)

    print("KERNEL_OK")
</pallas_src>

<mosaic_0001>
module attributes {stable_mosaic.version = 11 : i64} {
  func.func @_quantize_bits_kernel(%arg0: i32, %arg1: memref<8x512xf32, #tpu.memory_space<vmem>>, %arg2: memref<8x512xf32, #tpu.memory_space<vmem>>) attributes {dimension_semantics = [#tpu.dimension_semantics<parallel>], iteration_bounds = array<i64: 1>, scalar_prefetch = 0 : i64, scratch_operands = 0 : i64, tpu.core_type = #tpu.core_type<tc>, window_params = [{transform_indices = @transform_0, window_bounds = array<i64: 8, 512>}, {transform_indices = @transform_1, window_bounds = array<i64: 8, 512>}]} {
    %c0 = arith.constant 0 : index
    %c0_0 = arith.constant 0 : index
    %0 = vector.load %arg1[%c0, %c0_0] : memref<8x512xf32, #tpu.memory_space<vmem>>, vector<8x512xf32>
    %cst = arith.constant 1.600000e+01 : f32
    %1 = vector.broadcast %cst : f32 to vector<8x512xf32>
    %2 = arith.mulf %0, %1 : vector<8x512xf32>
    %cst_1 = arith.constant 5.000000e-01 : f32
    %3 = vector.broadcast %cst_1 : f32 to vector<8x512xf32>
    %4 = arith.subf %2, %3 : vector<8x512xf32>
    %5 = math.roundeven %4 : vector<8x512xf32>
    %6 = arith.fptosi %5 : vector<8x512xf32> to vector<8x512xi32>
    %c255_i32 = arith.constant 255 : i32
    %7 = vector.broadcast %c255_i32 : i32 to vector<8x512xi32>
    %8 = arith.andi %6, %7 : vector<8x512xi32>
    %9 = tpu.iota {dimensions = array<i32: 1>} : vector<8x512xi32>
    %c3_i32 = arith.constant 3 : i32
    %10 = vector.broadcast %c3_i32 : i32 to vector<8x512xi32>
    %11 = arith.andi %9, %10 : vector<8x512xi32>
    %c3_i32_2 = arith.constant 3 : i32
    %12 = vector.broadcast %c3_i32_2 : i32 to vector<8x512xi32>
    %13 = arith.subi %12, %11 : vector<8x512xi32>
    %14 = arith.shrsi %8, %13 : vector<8x512xi32>
    %c1_i32 = arith.constant 1 : i32
    %15 = vector.broadcast %c1_i32 : i32 to vector<8x512xi32>
    %16 = arith.andi %14, %15 : vector<8x512xi32>
    %17 = arith.sitofp %16 : vector<8x512xi32> to vector<8x512xf32>
    %c0_3 = arith.constant 0 : index
    %c0_4 = arith.constant 0 : index
    %18 = vector.load %arg2[%c0_3, %c0_4] : memref<8x512xf32, #tpu.memory_space<vmem>>, vector<8x512xf32>
    tpu.vector_store %arg2[%c0_3, %c0_4], %17 {strides = array<i32>} : memref<8x512xf32, #tpu.memory_space<vmem>>, vector<8x512xf32>,
    return
  }
  func.func @transform_0(%arg0: i32) -> (i32, i32) {
    %c0_i32 = arith.constant 0 : i32
    %c0_i32_0 = arith.constant 0 : i32
    return %arg0, %c0_i32 : i32, i32
  }
  func.func @transform_1(%arg0: i32) -> (i32, i32) {
    %c0_i32 = arith.constant 0 : i32
    %c0_i32_0 = arith.constant 0 : i32
    return %arg0, %c0_i32 : i32, i32
  }
}

</mosaic_0001>

<llo_original>
// kernel: tpu_custom_call.1
$region0: #{tpu_custom_call.1}
  #allocation0 [shape = 'u32[]', space=smem, size = 0x4, offset = 0x4, fixed_abs, tag = 'smem constant byte address 0x4 - core index']
  #allocation1 [shape = 'u32[144,128]{1,0:T(1,128)}', space=vmem, size = 0x12000, scoped, tag = 'internal scratch']
  %s0 = inlined_call_operand.hbm [shape: f32[8,512], index: 0, kind: input, shape index: {}]
  %s1 = inlined_call_operand.hbm [shape: f32[8,512], index: 1, kind: output, shape index: {}]
  %s2 = sld [smem:[#allocation0]]
  $region18: #{tpu_custom_call.1} parent=0
    _
  %s4 = ssub.s32 1, %s2
  %s5 = scalar_select 0, %s4, %s2
  $region1: #{tpu_custom_call.1} parent=0
    #allocation2 [shape = 'u8[16384]{0}', space=vmem, size = 0x4000, scoped, tag = 'input window, operand 0, single buffered']
    #allocation3 [shape = 's32[1]{0}', space=sflag, size = 0x4, scoped, tag = 'scoped memory for tpu_custom_call.1']
    #allocation4 [shape = 's32[1]{0}', space=sflag, size = 0x4, scoped, tag = 'scoped memory for tpu_custom_call.1']
    #allocation5 [shape = 'u8[16384]{0}', space=vmem, size = 0x4000, scoped, tag = 'output window, operand 0, single buffered']
    %6 = vsyncpa [#allocation3], 0
    %7 = vsyncpa [#allocation4], 0
    // Predicated region
    $region2: #{tpu_custom_call.1} parent=1 // pred_check
      _
    $region3: #{tpu_custom_call.1} parent=1 // pred_check_branch
      %9 = sbr.rel (0) target = $region5
    $region4: #{tpu_custom_call.1} parent=1 // pred_region
      %s11 = ssub.s32 512, 512
      %12 = vsyncadd [#allocation3], %s11
      %s14 = sshll.u32 [#allocation2], 4
      %s15 = int_to_ptr.vmem [resolvable:$true] %s14
      %17 = dma.hbm_to_vmem [thread:$0]  %s0, 512, %s15, [#allocation3]
    $region5: #{tpu_custom_call.1} parent=1 // pred_fallthru
      _
    // Predicated region
    $region6: #{tpu_custom_call.1} parent=1 // pred_check
      _
    $region7: #{tpu_custom_call.1} parent=1 // pred_check_branch
      %19 = sbr.rel (0) target = $region9
    $region8: #{tpu_custom_call.1} parent=1 // pred_region
      %20 = dma.done [#allocation3], 512
    $region9: #{tpu_custom_call.1} parent=1 // pred_fallthru
      _
    %v21 = vld [vmem:[#allocation2] sm:$0xff]
    %v22 = vld [vmem:[#allocation2 + $0x8] sm:$0xff]
    %v23 = vld [vmem:[#allocation2 + $0x10] sm:$0xff]
    %v24 = vld [vmem:[#allocation2 + $0x18] sm:$0xff]
    %v25 = vmul.f32 %v21, 16.0
    %v26 = vmul.f32 %v22, 16.0
    %v27 = vmul.f32 %v23, 16.0
    %v28 = vmul.f32 %v24, 16.0
    %v29 = vsub.f32 %v25, 0.5
    %v30 = vsub.f32 %v26, 0.5
    %v31 = vsub.f32 %v27, 0.5
    %v32 = vsub.f32 %v28, 0.5
    %v33 = vcvt.f32.s32.ties.to.even %v29
    %v34 = vcvt.f32.s32.ties.to.even %v30
    %v35 = vcvt.f32.s32.ties.to.even %v31
    %v36 = vcvt.f32.s32.ties.to.even %v32
    %v37 = vand.u32 %v33, 255
    %v38 = vand.u32 %v34, 255
    %v39 = vand.u32 %v35, 255
    %v40 = vand.u32 %v36, 255
    %v41 = vlaneseq
    %v42 = vand.u32 %v41, 127
    %v43 = vadd.s32 %v42, 128
    %v44 = vadd.s32 %v42, 256
    %v45 = vadd.s32 %v42, 384
    %v46 = vand.u32 %v42, 3
    %v47 = vand.u32 %v43, 3
    %v48 = vand.u32 %v44, 3
    %v49 = vand.u32 %v45, 3
    %v50 = vsub.s32 3, %v46
    %v51 = vsub.s32 3, %v47
    %v52 = vsub.s32 3, %v48
    %v53 = vsub.s32 3, %v49
    %v54 = vshra.s32 %v37, %v50
    %v55 = vshra.s32 %v38, %v51
    %v56 = vshra.s32 %v39, %v52
    %v57 = vshra.s32 %v40, %v53
    %v58 = vand.u32 %v54, 1
    %v59 = vand.u32 %v55, 1
    %v60 = vand.u32 %v56, 1
    %v61 = vand.u32 %v57, 1
    %v62 = vcvt.s32.f32 %v58
    %v63 = vcvt.s32.f32 %v59
    %v64 = vcvt.s32.f32 %v60
    %v65 = vcvt.s32.f32 %v61
    %66 = vst [vmem:[#allocation5] sm:$0xff] %v62
    %67 = vst [vmem:[#allocation5 + $0x8] sm:$0xff] %v63
    %68 = vst [vmem:[#allocation5 + $0x10] sm:$0xff] %v64
    %69 = vst [vmem:[#allocation5 + $0x18] sm:$0xff] %v65
    // Predicated region
    $region10: #{tpu_custom_call.1} parent=1 // pred_check
      _
    $region11: #{tpu_custom_call.1} parent=1 // pred_check_branch
      %71 = sbr.rel (0) target = $region13
    $region12: #{tpu_custom_call.1} parent=1 // pred_region
      %s73 = ssub.s32 512, 512
      %74 = vsyncadd [#allocation4], %s73
      %s76 = sshll.u32 [#allocation5], 4
      %s77 = int_to_ptr.vmem [resolvable:$true] %s76
      %79 = dma.vmem_to_hbm [thread:$0]  %s77, 512, %s1, [#allocation4]
    $region13: #{tpu_custom_call.1} parent=1 // pred_fallthru
      _
    // Predicated region
    $region14: #{tpu_custom_call.1} parent=1 // pred_check
      _
    $region15: #{tpu_custom_call.1} parent=1 // pred_check_branch
      %81 = sbr.rel (0) target = $region17
    $region16: #{tpu_custom_call.1} parent=1 // pred_region
      %82 = dma.done [#allocation4], 512
    $region17: #{tpu_custom_call.1} parent=1 // pred_fallthru
      _
    %83 = vsyncpa [#allocation3], 1
    %84 = vsyncpa [#allocation4], 1

</llo_original>
